<compile_context>
chip_gen: v7x
topology: tpu7x:2x2x1
jax: 0.10.0
libtpu: 0.0.40
codegen_flags: <defaults>
</compile_context>

<pallas_src>
import functools

import jax
import jax.numpy as jnp
from jax.experimental import pallas as pl
from jax.experimental.pallas import tpu as pltpu


def _pick_tile(S, preferred):
    """Largest nice tile (multiple of 8) that divides S, preferring `preferred`."""
    for t in (preferred, 512, 256, 128, 64, 32, 16, 8):
        if t <= S and S % t == 0:
            return t
    return S


def _vmem_limit(byte_estimate):
    # Request only what the kernel actually needs (plus headroom); never reserve more than
    # v7x's 64 MiB per-TC VMEM (harmless on 128 MiB v5e/v6e, avoids starving XLA on v7x).
    return int(min(64 * 1024 * 1024, max(8 * 1024 * 1024, 2 * byte_estimate)))


# ----------------------------------------------------------------------------- stage 1
def _kv_proj_kernel(k_ref, v_ref, wk_ref, bk_ref, wv_ref, bv_ref, kp_ref, vp_ref,
                    *, nb_heads, dim_key, dim_value):
    H, Dk, Dv = nb_heads, dim_key, dim_value
    k_in = k_ref[0].astype(jnp.bfloat16)           # (ts, Dm)
    v_in = v_ref[0].astype(jnp.bfloat16)
    # Fused lane-dense projections for all heads: bf16 MXU operands, f32 accumulation.
    kp = (jnp.dot(k_in, wk_ref[...], preferred_element_type=jnp.float32)
          + bk_ref[...]).astype(kp_ref.dtype)      # (ts, H*Dk) bf16
    vp = (jnp.dot(v_in, wv_ref[...], preferred_element_type=jnp.float32)
          + bv_ref[...]).astype(vp_ref.dtype)      # (ts, H*Dv) bf16
    # Relayout to head-major ONCE here so stage 2 never slices per head per kv step.
    for h in range(H):
        kp_ref[0, h] = kp[:, h * Dk:(h + 1) * Dk]
        vp_ref[0, h] = vp[:, h * Dv:(h + 1) * Dv]


# ----------------------------------------------------------------------------- stage 2
def _flash_mha_kernel(q_ref, k_ref, v_ref, wq_ref, bq_ref, o_ref,
                      qp_ref, m_ref, l_ref, acc_ref, *, nb_heads, dim_key, dim_value):
    H, Dk, Dv = nb_heads, dim_key, dim_value
    ki = pl.program_id(2)

    @pl.when(ki == 0)
    def _init():
        # Project Q for all heads once per q-tile (scale already folded into wq/bq),
        # cache head-major bf16 so it is never recomputed / resliced per kv tile.
        qp = (jnp.dot(q_ref[0].astype(jnp.bfloat16), wq_ref[...],
                      preferred_element_type=jnp.float32)
              + bq_ref[...]).astype(jnp.bfloat16)          # (tq, H*Dk)
        for h in range(H):
            qp_ref[h] = qp[:, h * Dk:(h + 1) * Dk]
        m_ref[...] = jnp.full_like(m_ref, -jnp.inf)
        l_ref[...] = jnp.zeros_like(l_ref)
        acc_ref[...] = jnp.zeros_like(acc_ref)

    qp = qp_ref[...]          # (H, tq, Dk) bf16
    kp = k_ref[0]             # (H, tk, Dk) bf16
    vp = v_ref[0]             # (H, tk, Dv) bf16

    # TODO(synk): masked=True (causal) path of ScaledDotProductAttention not implemented;
    #             the module default is masked=False.
    # All heads batched into one MXU dot (no per-head lane-offset slicing in the kv loop).
    s = jnp.einsum('hqd,hkd->hqk', qp, kp,
                   preferred_element_type=jnp.float32)               # (H, tq, tk) f32

    m_prev = m_ref[...]       # (H, tq, 128) lane-replicated running max
    l_prev = l_ref[...]       # (H, tq, 128) lane-replicated running sum
    m_next = jnp.maximum(m_prev, jnp.max(s, axis=-1, keepdims=True))
    alpha = jnp.exp(m_prev - m_next)
    p = jnp.exp(s - m_next[..., :1])                                 # (H, tq, tk)
    l_ref[...] = alpha * l_prev + jnp.sum(p, axis=-1, keepdims=True)
    m_ref[...] = m_next
    acc_ref[...] = alpha[..., :1] * acc_ref[...] + jnp.einsum(
        'hqk,hkd->hqd', p.astype(jnp.bfloat16), vp,
        preferred_element_type=jnp.float32)                          # (H, tq, Dv) f32

    @pl.when(ki == pl.num_programs(2) - 1)
    def _finalize():
        acc = acc_ref[...]
        l = l_ref[...]
        # Exact f32 divide (no approx reciprocal) for parity with the f32 reference.
        heads = [(acc[h] / l[h, :, :1]).astype(o_ref.dtype) for h in range(H)]
        # Single lane-dense (tq, H*Dv) store == torch.cat(heads, -1); once per q-tile.
        o_ref[0] = jnp.concatenate(heads, axis=-1)


# ----------------------------------------------------------------------------- wrapper
def multi_head_attention(Q, K, V, params, *, dim_key, dim_value, nb_heads,
                         q_tile=512, kv_tile=512):
    """Q, K, V: (B, S, Dm) with Dm = nb_heads * dim_key. Returns (B, S, nb_heads * dim_value)."""
    B, S, Dm = Q.shape
    H, Dk, Dv = nb_heads, dim_key, dim_value
    assert Dm == H * Dk
    # PyTorch module builds ScaledDotProductAttention(self.dim_model): scale = 1/sqrt(dim_model).
    scale = 1.0 / (Dm ** 0.5)

    wq, bq, wk, bk, wv, bv = params  # wq/wk: (H, Dm, Dk); wv: (H, Dm, Dv); biases (H, Dk|Dv)

    # Fused lane-dense weights, bf16 for the MXU; biases kept f32 (added post-accumulation).
    wq_f = (jnp.transpose(wq, (1, 0, 2)).reshape(Dm, H * Dk) * scale).astype(jnp.bfloat16)
    bq_f = (bq.reshape(1, H * Dk) * scale).astype(jnp.float32)
    wk_f = jnp.transpose(wk, (1, 0, 2)).reshape(Dm, H * Dk).astype(jnp.bfloat16)
    bk_f = bk.reshape(1, H * Dk).astype(jnp.float32)
    wv_f = jnp.transpose(wv, (1, 0, 2)).reshape(Dm, H * Dv).astype(jnp.bfloat16)
    bv_f = bv.reshape(1, H * Dv).astype(jnp.float32)

    # ---------------- Stage 1: fused K/V projection, stored head-major in bf16 -------------
    ts = _pick_tile(S, 512)
    s1_bytes = (2 * (2 * ts * Dm * 4 + ts * H * Dk * 2 + ts * H * Dv * 2)
                + 2 * (Dm * H * (Dk + Dv) * 2 + H * (Dk + Dv) * 4))
    kv_proj = functools.partial(_kv_proj_kernel, nb_heads=H, dim_key=Dk, dim_value=Dv)
    Kp, Vp = pl.pallas_call(
        kv_proj,
        out_shape=(jax.ShapeDtypeStruct((B, H, S, Dk), jnp.bfloat16),
                   jax.ShapeDtypeStruct((B, H, S, Dv), jnp.bfloat16)),
        grid_spec=pltpu.PrefetchScalarGridSpec(
            num_scalar_prefetch=0,
            grid=(B, S // ts),
            in_specs=[
                pl.BlockSpec((1, ts, Dm), lambda b, s: (b, s, 0)),        # K
                pl.BlockSpec((1, ts, Dm), lambda b, s: (b, s, 0)),        # V
                pl.BlockSpec((Dm, H * Dk), lambda b, s: (0, 0)),          # Wk (fused heads)
                pl.BlockSpec((1, H * Dk), lambda b, s: (0, 0)),           # bk
                pl.BlockSpec((Dm, H * Dv), lambda b, s: (0, 0)),          # Wv (fused heads)
                pl.BlockSpec((1, H * Dv), lambda b, s: (0, 0)),           # bv
            ],
            out_specs=[
                pl.BlockSpec((1, H, ts, Dk), lambda b, s: (b, 0, s, 0)),  # Kp head-major
                pl.BlockSpec((1, H, ts, Dv), lambda b, s: (b, 0, s, 0)),  # Vp head-major
            ],
        ),
        compiler_params=pltpu.CompilerParams(
            dimension_semantics=("parallel", "parallel"),
            vmem_limit_bytes=_vmem_limit(s1_bytes)),
    )(K, V, wk_f, bk_f, wv_f, bv_f)

    # ---------------- Stage 2: flash attention (online softmax over kv tiles) --------------
    tq = _pick_tile(S, q_tile)
    tk = _pick_tile(S, kv_tile)
    kernel = functools.partial(_flash_mha_kernel, nb_heads=H, dim_key=Dk, dim_value=Dv)

    s2_bytes = (2 * (tq * Dm * 4 + H * tk * Dk * 2 + H * tk * Dv * 2 + tq * H * Dv * 4)
                + 2 * (Dm * H * Dk * 2 + H * Dk * 4)
                + H * tq * Dk * 2 + 2 * H * tq * 128 * 4 + H * tq * Dv * 4)

    flops = int(2 * B * S * Dm * H * Dk            # Q projection
                + 2 * B * H * S * S * Dk           # QK^T
                + 2 * B * H * S * S * Dv)          # PV
    bytes_accessed = int(4 * B * S * Dm + 4 * B * S * H * Dv
                         + 2 * (B * H * S * Dk + B * H * S * Dv) * (S // tq))

    out = pl.pallas_call(
        kernel,
        out_shape=jax.ShapeDtypeStruct((B, S, H * Dv), Q.dtype),
        grid_spec=pltpu.PrefetchScalarGridSpec(
            num_scalar_prefetch=0,
            # B*(S//tq) parallel blocks; with B >= 2 both v7x TensorCores get work.
            grid=(B, S // tq, S // tk),
            in_specs=[
                pl.BlockSpec((1, tq, Dm), lambda b, qi, ki: (b, qi, 0)),         # Q (raw)
                pl.BlockSpec((1, H, tk, Dk), lambda b, qi, ki: (b, 0, ki, 0)),   # Kp head-major
                pl.BlockSpec((1, H, tk, Dv), lambda b, qi, ki: (b, 0, ki, 0)),   # Vp head-major
                pl.BlockSpec((Dm, H * Dk), lambda b, qi, ki: (0, 0)),            # Wq (scale folded)
                pl.BlockSpec((1, H * Dk), lambda b, qi, ki: (0, 0)),             # bq (scale folded)
            ],
            out_specs=pl.BlockSpec((1, tq, H * Dv), lambda b, qi, ki: (b, qi, 0)),
            scratch_shapes=[
                pltpu.VMEM((H, tq, Dk), jnp.bfloat16),   # cached projected Q (head-major)
                pltpu.VMEM((H, tq, 128), jnp.float32),   # running max  m (lane-replicated)
                pltpu.VMEM((H, tq, 128), jnp.float32),   # running sum  l (lane-replicated)
                pltpu.VMEM((H, tq, Dv), jnp.float32),    # output accumulator
            ],
        ),
        compiler_params=pltpu.CompilerParams(
            dimension_semantics=("parallel", "parallel", "arbitrary"),
            vmem_limit_bytes=_vmem_limit(s2_bytes)),
        cost_estimate=pl.CostEstimate(flops=flops,
                                      transcendentals=int(B * H * S * S),
                                      bytes_accessed=bytes_accessed),
    )(Q, Kp, Vp, wq_f, bq_f)

    return out  # (B, S, H*Dv) — already in torch.cat(heads, -1) layout


# ----------------------------------------------------------------------------- params / ref
def init_params(key, dim_model, dim_key, dim_value, nb_heads):
    """nn.Linear-style init (uniform ±1/sqrt(fan_in)); weights stored pre-transposed (H, Dm, Dout)."""
    bound = 1.0 / (dim_model ** 0.5)
    ks = jax.random.split(key, 6)
    wq = jax.random.uniform(ks[0], (nb_heads, dim_model, dim_key), jnp.float32, -bound, bound)
    bq = jax.random.uniform(ks[1], (nb_heads, dim_key), jnp.float32, -bound, bound)
    wk = jax.random.uniform(ks[2], (nb_heads, dim_model, dim_key), jnp.float32, -bound, bound)
    bk = jax.random.uniform(ks[3], (nb_heads, dim_key), jnp.float32, -bound, bound)
    wv = jax.random.uniform(ks[4], (nb_heads, dim_model, dim_value), jnp.float32, -bound, bound)
    bv = jax.random.uniform(ks[5], (nb_heads, dim_value), jnp.float32, -bound, bound)
    return wq, bq, wk, bk, wv, bv


def _reference(Q, K, V, params, *, dim_key, dim_value, nb_heads):
    """Pure-JAX f32 reference replicating the PyTorch forward semantics."""
    wq, bq, wk, bk, wv, bv = params
    Dm = Q.shape[-1]
    scale = 1.0 / (Dm ** 0.5)
    heads = []
    for h in range(nb_heads):
        q = Q @ wq[h] + bq[h]
        k = K @ wk[h] + bk[h]
        v = V @ wv[h] + bv[h]
        s = jnp.einsum("bqd,bkd->bqk", q, k) * scale
        p = jax.nn.softmax(s, axis=-1)
        heads.append(jnp.einsum("bqk,bkd->bqd", p, v))
    return jnp.concatenate(heads, axis=-1)


if __name__ == "__main__":
    # Small config: dim_key=8, dim_value=8, nb_heads=4 -> dim_model=32
    dim_key, dim_value, nb_heads = 8, 8, 4
    dim_model = dim_key * nb_heads
    B, S = 2, 8

    key = jax.random.PRNGKey(0)
    kq, kk, kv, kp = jax.random.split(key, 4)
    Q = jax.random.normal(kq, (B, S, dim_model), jnp.float32)
    K = jax.random.normal(kk, (B, S, dim_model), jnp.float32)
    V = jax.random.normal(kv, (B, S, dim_model), jnp.float32)

    params = init_params(kp, dim_model, dim_key, dim_value, nb_heads)

    out = multi_head_attention(Q, K, V, params,
                               dim_key=dim_key, dim_value=dim_value, nb_heads=nb_heads)
    out = jax.block_until_ready(out)

    ref = _reference(Q, K, V, params,
                     dim_key=dim_key, dim_value=dim_value, nb_heads=nb_heads)
    assert out.shape == (B, S, nb_heads * dim_value)
    # Tolerance accounts for bf16 MXU operands (f32 accumulation preserved).
    err = float(jnp.max(jnp.abs(out - ref)))
    assert err < 2e-2, f"max abs err {err}"

    print("KERNEL_OK")
</pallas_src>

<mosaic_0001>
module attributes {stable_mosaic.version = 11 : i64} {
  func.func @_kv_proj_kernel(%arg0: i32, %arg1: i32, %arg2: memref<1x8x32xf32, #tpu.memory_space<vmem>>, %arg3: memref<1x8x32xf32, #tpu.memory_space<vmem>>, %arg4: memref<32x32xbf16, #tpu.memory_space<vmem>>, %arg5: memref<1x32xf32, #tpu.memory_space<vmem>>, %arg6: memref<32x32xbf16, #tpu.memory_space<vmem>>, %arg7: memref<1x32xf32, #tpu.memory_space<vmem>>, %arg8: memref<1x4x8x8xbf16, #tpu.memory_space<vmem>>, %arg9: memref<1x4x8x8xbf16, #tpu.memory_space<vmem>>) attributes {dimension_semantics = [#tpu.dimension_semantics<parallel>, #tpu.dimension_semantics<parallel>], iteration_bounds = array<i64: 2, 1>, scalar_prefetch = 0 : i64, scratch_operands = 0 : i64, tpu.core_type = #tpu.core_type<tc>, window_params = [{transform_indices = @transform_0, window_bounds = array<i64: 1, 8, 32>}, {transform_indices = @transform_1, window_bounds = array<i64: 1, 8, 32>}, {pipeline_mode = #tpu.pipeline_mode<synchronous>, transform_indices = @transform_2, window_bounds = array<i64: 32, 32>}, {pipeline_mode = #tpu.pipeline_mode<synchronous>, transform_indices = @transform_3, window_bounds = array<i64: 1, 32>}, {pipeline_mode = #tpu.pipeline_mode<synchronous>, transform_indices = @transform_4, window_bounds = array<i64: 32, 32>}, {pipeline_mode = #tpu.pipeline_mode<synchronous>, transform_indices = @transform_5, window_bounds = array<i64: 1, 32>}, {transform_indices = @transform_6, window_bounds = array<i64: 1, 4, 8, 8>}, {transform_indices = @transform_7, window_bounds = array<i64: 1, 4, 8, 8>}]} {
    %c0 = arith.constant 0 : index
    %c0_0 = arith.constant 0 : index
    %c0_1 = arith.constant 0 : index
    %0 = vector.load %arg2[%c0, %c0_0, %c0_1] : memref<1x8x32xf32, #tpu.memory_space<vmem>>, vector<1x8x32xf32>
    %1 = vector.shape_cast %0 : vector<1x8x32xf32> to vector<8x32xf32>
    %2 = arith.truncf %1 : vector<8x32xf32> to vector<8x32xbf16>
    %c0_2 = arith.constant 0 : index
    %c0_3 = arith.constant 0 : index
    %c0_4 = arith.constant 0 : index
    %3 = vector.load %arg3[%c0_2, %c0_3, %c0_4] : memref<1x8x32xf32, #tpu.memory_space<vmem>>, vector<1x8x32xf32>
    %4 = vector.shape_cast %3 : vector<1x8x32xf32> to vector<8x32xf32>
    %5 = arith.truncf %4 : vector<8x32xf32> to vector<8x32xbf16>
    %c0_5 = arith.constant 0 : index
    %c0_6 = arith.constant 0 : index
    %6 = vector.load %arg4[%c0_5, %c0_6] : memref<32x32xbf16, #tpu.memory_space<vmem>>, vector<32x32xbf16>
    %cst = arith.constant dense<0.000000e+00> : vector<8x32xf32>
    %7 = tpu.matmul %2, %6, %cst {dimension_numbers = #tpu.dot_dimension_numbers<[1], [0], [0], [1], [0, 0, 1, 1], [], []>} : vector<8x32xbf16>, vector<32x32xbf16>, vector<8x32xf32> -> vector<8x32xf32>
    %c0_7 = arith.constant 0 : index
    %c0_8 = arith.constant 0 : index
    %8 = vector.load %arg5[%c0_7, %c0_8] : memref<1x32xf32, #tpu.memory_space<vmem>>, vector<1x32xf32>
    %9 = vector.broadcast %8 : vector<1x32xf32> to vector<8x32xf32>
    %10 = arith.addf %7, %9 : vector<8x32xf32>
    %11 = arith.truncf %10 : vector<8x32xf32> to vector<8x32xbf16>
    %c0_9 = arith.constant 0 : index
    %c0_10 = arith.constant 0 : index
    %12 = vector.load %arg6[%c0_9, %c0_10] : memref<32x32xbf16, #tpu.memory_space<vmem>>, vector<32x32xbf16>
    %cst_11 = arith.constant dense<0.000000e+00> : vector<8x32xf32>
    %13 = tpu.matmul %5, %12, %cst_11 {dimension_numbers = #tpu.dot_dimension_numbers<[1], [0], [0], [1], [0, 0, 1, 1], [], []>} : vector<8x32xbf16>, vector<32x32xbf16>, vector<8x32xf32> -> vector<8x32xf32>
    %c0_12 = arith.constant 0 : index
    %c0_13 = arith.constant 0 : index
    %14 = vector.load %arg7[%c0_12, %c0_13] : memref<1x32xf32, #tpu.memory_space<vmem>>, vector<1x32xf32>
    %15 = vector.broadcast %14 : vector<1x32xf32> to vector<8x32xf32>
    %16 = arith.addf %13, %15 : vector<8x32xf32>
    %17 = arith.truncf %16 : vector<8x32xf32> to vector<8x32xbf16>
    %18 = vector.extract_strided_slice %11 {offsets = [0, 0], sizes = [8, 8], strides = [1, 1]} : vector<8x32xbf16> to vector<8x8xbf16>
    %c0_14 = arith.constant 0 : index
    %c0_15 = arith.constant 0 : index
    %c0_16 = arith.constant 0 : index
    %c0_17 = arith.constant 0 : index
    %19 = vector.load %arg8[%c0_14, %c0_15, %c0_16, %c0_17] : memref<1x4x8x8xbf16, #tpu.memory_space<vmem>>, vector<1x1x8x8xbf16>
    %20 = vector.shape_cast %19 : vector<1x1x8x8xbf16> to vector<8x8xbf16>
    %21 = vector.shape_cast %18 : vector<8x8xbf16> to vector<1x1x8x8xbf16>
    tpu.vector_store %arg8[%c0_14, %c0_15, %c0_16, %c0_17], %21 {strides = array<i32>} : memref<1x4x8x8xbf16, #tpu.memory_space<vmem>>, vector<1x1x8x8xbf16>,
    %22 = vector.extract_strided_slice %17 {offsets = [0, 0], sizes = [8, 8], strides = [1, 1]} : vector<8x32xbf16> to vector<8x8xbf16>
    %c0_18 = arith.constant 0 : index
    %c0_19 = arith.constant 0 : index
    %c0_20 = arith.constant 0 : index
    %c0_21 = arith.constant 0 : index
    %23 = vector.load %arg9[%c0_18, %c0_19, %c0_20, %c0_21] : memref<1x4x8x8xbf16, #tpu.memory_space<vmem>>, vector<1x1x8x8xbf16>
    %24 = vector.shape_cast %23 : vector<1x1x8x8xbf16> to vector<8x8xbf16>
    %25 = vector.shape_cast %22 : vector<8x8xbf16> to vector<1x1x8x8xbf16>
    tpu.vector_store %arg9[%c0_18, %c0_19, %c0_20, %c0_21], %25 {strides = array<i32>} : memref<1x4x8x8xbf16, #tpu.memory_space<vmem>>, vector<1x1x8x8xbf16>,
    %26 = vector.extract_strided_slice %11 {offsets = [0, 8], sizes = [8, 8], strides = [1, 1]} : vector<8x32xbf16> to vector<8x8xbf16>
    %c0_22 = arith.constant 0 : index
    %c1 = arith.constant 1 : index
    %c0_23 = arith.constant 0 : index
    %c0_24 = arith.constant 0 : index
    %27 = vector.load %arg8[%c0_22, %c1, %c0_23, %c0_24] : memref<1x4x8x8xbf16, #tpu.memory_space<vmem>>, vector<1x1x8x8xbf16>
    %28 = vector.shape_cast %27 : vector<1x1x8x8xbf16> to vector<8x8xbf16>
    %29 = vector.shape_cast %26 : vector<8x8xbf16> to vector<1x1x8x8xbf16>
    tpu.vector_store %arg8[%c0_22, %c1, %c0_23, %c0_24], %29 {strides = array<i32>} : memref<1x4x8x8xbf16, #tpu.memory_space<vmem>>, vector<1x1x8x8xbf16>,
    %30 = vector.extract_strided_slice %17 {offsets = [0, 8], sizes = [8, 8], strides = [1, 1]} : vector<8x32xbf16> to vector<8x8xbf16>
    %c0_25 = arith.constant 0 : index
    %c1_26 = arith.constant 1 : index
    %c0_27 = arith.constant 0 : index
    %c0_28 = arith.constant 0 : index
    %31 = vector.load %arg9[%c0_25, %c1_26, %c0_27, %c0_28] : memref<1x4x8x8xbf16, #tpu.memory_space<vmem>>, vector<1x1x8x8xbf16>
    %32 = vector.shape_cast %31 : vector<1x1x8x8xbf16> to vector<8x8xbf16>
    %33 = vector.shape_cast %30 : vector<8x8xbf16> to vector<1x1x8x8xbf16>
    tpu.vector_store %arg9[%c0_25, %c1_26, %c0_27, %c0_28], %33 {strides = array<i32>} : memref<1x4x8x8xbf16, #tpu.memory_space<vmem>>, vector<1x1x8x8xbf16>,
    %34 = vector.extract_strided_slice %11 {offsets = [0, 16], sizes = [8, 8], strides = [1, 1]} : vector<8x32xbf16> to vector<8x8xbf16>
    %c0_29 = arith.constant 0 : index
    %c2 = arith.constant 2 : index
    %c0_30 = arith.constant 0 : index
    %c0_31 = arith.constant 0 : index
    %35 = vector.load %arg8[%c0_29, %c2, %c0_30, %c0_31] : memref<1x4x8x8xbf16, #tpu.memory_space<vmem>>, vector<1x1x8x8xbf16>
    %36 = vector.shape_cast %35 : vector<1x1x8x8xbf16> to vector<8x8xbf16>
    %37 = vector.shape_cast %34 : vector<8x8xbf16> to vector<1x1x8x8xbf16>
    tpu.vector_store %arg8[%c0_29, %c2, %c0_30, %c0_31], %37 {strides = array<i32>} : memref<1x4x8x8xbf16, #tpu.memory_space<vmem>>, vector<1x1x8x8xbf16>,
    %38 = vector.extract_strided_slice %17 {offsets = [0, 16], sizes = [8, 8], strides = [1, 1]} : vector<8x32xbf16> to vector<8x8xbf16>
    %c0_32 = arith.constant 0 : index
    %c2_33 = arith.constant 2 : index
    %c0_34 = arith.constant 0 : index
    %c0_35 = arith.constant 0 : index
    %39 = vector.load %arg9[%c0_32, %c2_33, %c0_34, %c0_35] : memref<1x4x8x8xbf16, #tpu.memory_space<vmem>>, vector<1x1x8x8xbf16>
    %40 = vector.shape_cast %39 : vector<1x1x8x8xbf16> to vector<8x8xbf16>
    %41 = vector.shape_cast %38 : vector<8x8xbf16> to vector<1x1x8x8xbf16>
    tpu.vector_store %arg9[%c0_32, %c2_33, %c0_34, %c0_35], %41 {strides = array<i32>} : memref<1x4x8x8xbf16, #tpu.memory_space<vmem>>, vector<1x1x8x8xbf16>,
    %42 = vector.extract_strided_slice %11 {offsets = [0, 24], sizes = [8, 8], strides = [1, 1]} : vector<8x32xbf16> to vector<8x8xbf16>
    %c0_36 = arith.constant 0 : index
    %c3 = arith.constant 3 : index
    %c0_37 = arith.constant 0 : index
    %c0_38 = arith.constant 0 : index
    %43 = vector.load %arg8[%c0_36, %c3, %c0_37, %c0_38] : memref<1x4x8x8xbf16, #tpu.memory_space<vmem>>, vector<1x1x8x8xbf16>
    %44 = vector.shape_cast %43 : vector<1x1x8x8xbf16> to vector<8x8xbf16>
    %45 = vector.shape_cast %42 : vector<8x8xbf16> to vector<1x1x8x8xbf16>
    tpu.vector_store %arg8[%c0_36, %c3, %c0_37, %c0_38], %45 {strides = array<i32>} : memref<1x4x8x8xbf16, #tpu.memory_space<vmem>>, vector<1x1x8x8xbf16>,
    %46 = vector.extract_strided_slice %17 {offsets = [0, 24], sizes = [8, 8], strides = [1, 1]} : vector<8x32xbf16> to vector<8x8xbf16>
    %c0_39 = arith.constant 0 : index
    %c3_40 = arith.constant 3 : index
    %c0_41 = arith.constant 0 : index
    %c0_42 = arith.constant 0 : index
    %47 = vector.load %arg9[%c0_39, %c3_40, %c0_41, %c0_42] : memref<1x4x8x8xbf16, #tpu.memory_space<vmem>>, vector<1x1x8x8xbf16>
    %48 = vector.shape_cast %47 : vector<1x1x8x8xbf16> to vector<8x8xbf16>
    %49 = vector.shape_cast %46 : vector<8x8xbf16> to vector<1x1x8x8xbf16>
    tpu.vector_store %arg9[%c0_39, %c3_40, %c0_41, %c0_42], %49 {strides = array<i32>} : memref<1x4x8x8xbf16, #tpu.memory_space<vmem>>, vector<1x1x8x8xbf16>,
    return
  }
  func.func @transform_0(%arg0: i32, %arg1: i32) -> (i32, i32, i32) {
    %c0_i32 = arith.constant 0 : i32
    %c0_i32_0 = arith.constant 0 : i32
    return %arg0, %arg1, %c0_i32 : i32, i32, i32
  }
  func.func @transform_1(%arg0: i32, %arg1: i32) -> (i32, i32, i32) {
    %c0_i32 = arith.constant 0 : i32
    %c0_i32_0 = arith.constant 0 : i32
    return %arg0, %arg1, %c0_i32 : i32, i32, i32
  }
  func.func @transform_2(%arg0: i32, %arg1: i32) -> (i32, i32) {
    %c0_i32 = arith.constant 0 : i32
    %c0_i32_0 = arith.constant 0 : i32
    %c0_i32_1 = arith.constant 0 : i32
    return %c0_i32, %c0_i32_0 : i32, i32
  }
  func.func @transform_3(%arg0: i32, %arg1: i32) -> (i32, i32) {
    %c0_i32 = arith.constant 0 : i32
    %c0_i32_0 = arith.constant 0 : i32
    %c0_i32_1 = arith.constant 0 : i32
    return %c0_i32, %c0_i32_0 : i32, i32
  }
  func.func @transform_4(%arg0: i32, %arg1: i32) -> (i32, i32) {
    %c0_i32 = arith.constant 0 : i32
    %c0_i32_0 = arith.constant 0 : i32
    %c0_i32_1 = arith.constant 0 : i32
    return %c0_i32, %c0_i32_0 : i32, i32
  }
  func.func @transform_5(%arg0: i32, %arg1: i32) -> (i32, i32) {
    %c0_i32 = arith.constant 0 : i32
    %c0_i32_0 = arith.constant 0 : i32
    %c0_i32_1 = arith.constant 0 : i32
    return %c0_i32, %c0_i32_0 : i32, i32
  }
  func.func @transform_6(%arg0: i32, %arg1: i32) -> (i32, i32, i32, i32) {
    %c0_i32 = arith.constant 0 : i32
    %c0_i32_0 = arith.constant 0 : i32
    %c0_i32_1 = arith.constant 0 : i32
    return %arg0, %c0_i32, %arg1, %c0_i32_0 : i32, i32, i32, i32
  }
  func.func @transform_7(%arg0: i32, %arg1: i32) -> (i32, i32, i32, i32) {
    %c0_i32 = arith.constant 0 : i32
    %c0_i32_0 = arith.constant 0 : i32
    %c0_i32_1 = arith.constant 0 : i32
    return %arg0, %c0_i32, %arg1, %c0_i32_0 : i32, i32, i32, i32
  }
}

</mosaic_0001>

<llo_original>
// kernel: tpu_custom_call.1
$region0: #{tpu_custom_call.1}
  #allocation0 [shape = 'u32[]', space=smem, size = 0x4, offset = 0x4, fixed_abs, tag = 'smem constant byte address 0x4 - core index']
  #allocation1 [shape = 'u32[144,128]{1,0:T(1,128)}', space=vmem, size = 0x12000, scoped, tag = 'internal scratch']
  %s0 = inlined_call_operand.hbm [shape: f32[2,8,32], index: 0, kind: input, shape index: {}]
  %s1 = inlined_call_operand.hbm [shape: f32[2,8,32], index: 1, kind: input, shape index: {}]
  %s2 = inlined_call_operand.hbm [shape: bf16[32,32], index: 2, kind: input, shape index: {}]
  %s3 = inlined_call_operand.vmem [shape: f32[1,32], index: 3, kind: input, shape index: {}]
  %s4 = inlined_call_operand.hbm [shape: bf16[32,32], index: 4, kind: input, shape index: {}]
  %s5 = inlined_call_operand.vmem [shape: f32[1,32], index: 5, kind: input, shape index: {}]
  %s6 = inlined_call_operand.hbm [shape: bf16[2,4,8,8], index: 6, kind: output, shape index: {0}]
  %s7 = inlined_call_operand.hbm [shape: bf16[2,4,8,8], index: 7, kind: output, shape index: {1}]
  %8 = xla_tuple %s6, %s7
  %s9 = sld [smem:[#allocation0]]
  $region81: #{tpu_custom_call.1} parent=0
    _
  %s11 = ssub.s32 1, %s9
  %s12 = scalar_select 0, %s11, %s9
  $region1: #{tpu_custom_call.1} parent=0
    #allocation2 [shape = 'u8[8192]{0}', space=vmem, size = 0x2000, scoped, tag = 'input window, operand 0']
    #allocation3 [shape = 's32[2]{0}', space=sflag, size = 0x8, scoped, tag = 'scoped memory for tpu_custom_call.1']
    #allocation4 [shape = 's32[2]{0}', space=sflag, size = 0x8, scoped, tag = 'scoped memory for tpu_custom_call.1']
    #allocation5 [shape = 'u8[8192]{0}', space=vmem, size = 0x2000, scoped, tag = 'input window, operand 1']
    #allocation6 [shape = 's32[2]{0}', space=sflag, size = 0x8, scoped, tag = 'scoped memory for tpu_custom_call.1']
    #allocation7 [shape = 'u8[8192]{0}', space=vmem, size = 0x2000, scoped, tag = 'input window, operand 2, single buffered']
    #allocation8 [shape = 'u8[8192]{0}', space=vmem, size = 0x2000, scoped, tag = 'input window, operand 4, single buffered']
    #allocation9 [shape = 's32[1]{0}', space=sflag, size = 0x4, scoped, tag = 'scoped memory for tpu_custom_call.1']
    #allocation10 [shape = 'u8[16384]{0}', space=vmem, size = 0x4000, scoped, tag = 'output window, operand 0']
    #allocation11 [shape = 'u8[16384]{0}', space=vmem, size = 0x4000, scoped, tag = 'output window, operand 1']
    #allocation12 [shape = 's32[2]{0}', space=sflag, size = 0x8, scoped, tag = 'scoped memory for tpu_custom_call.1']
    %13 = vsyncpa [#allocation3], 0
    %s14 = scalar_lea.sflag [#allocation3], 1
    %15 = vsyncpa %s14, 0
    %16 = vsyncpa [#allocation6], 0
    %s17 = scalar_lea.sflag [#allocation6], 1
    %18 = vsyncpa %s17, 0
    %19 = vsyncpa [#allocation9], 0
    %20 = vsyncpa [#allocation4], 0
    %s21 = scalar_lea.sflag [#allocation4], 1
    %22 = vsyncpa %s21, 0
    %23 = vsyncpa [#allocation12], 0
    %s24 = scalar_lea.sflag [#allocation12], 1
    %25 = vsyncpa %s24, 0
    loop: start=0, step=1, limit=4
    $region2: #{tpu_custom_call.1} parent=1 // loop_pre_header
      _
    $region3: #{tpu_custom_call.1} parent=1 // loop_header
      %s27 = sphi 0, %s31
      %p28 = scmp.ge.s32.totalorder %s27, 4
      %s34 = sphi 0, %s46
      %s35 = sphi 0, %s42
      %s36 = sphi 0, %s34
      %s37 = sphi 0, %s35
      %s38 = sphi 0, %s36
      %s39 = sphi 0, %s37
      %s51 = sphi 0, %s53
      %s54 = sphi 0, %s51
      %s55 = sphi 0, %s54
      %s71 = sphi 0, %s55
      %s79 = sphi 0, %s81
      %s82 = sphi 0, %s79
      %s83 = sphi 0, %s82
      %s99 = sphi 0, %s83
      %s103 = sphi 0, %s103
      %s105 = sphi 0, %s103
      %s106 = sphi 0, %s105
      %s120 = sphi 0, %s106
      %s124 = sphi 0, %s124
      %s126 = sphi 0, %s124
      %s127 = sphi 0, %s126
      %s141 = sphi 0, %s127
      %s145 = sphi 0, %s145
      %s147 = sphi 0, %s145
      %s148 = sphi 0, %s147
      %s162 = sphi 0, %s148
      %s166 = sphi 0, %s166
      %s168 = sphi 0, %s166
      %s169 = sphi 0, %s168
      %s183 = sphi 0, %s169
      %s191 = sphi 0, %s193
      %s194 = sphi 0, %s191
      %s195 = sphi 0, %s194
      %s211 = sphi 0, %s195
      %s219 = sphi 0, %s221
      %s222 = sphi 0, %s219
      %s223 = sphi 0, %s222
      %s239 = sphi 0, %s223
    $region4: #{tpu_custom_call.1} parent=1 // loop_header_branch
      %30 = sbr.rel (%p28) target = $region8
    $region5: #{tpu_custom_call.1} parent=1 // loop_body
      %s32 = ssub.s32 %s27, 1
      %s33 = ssub.s32 %s27, 2
      %s40 = sadd.s32 1, %s35
      %p41 = scmp.ge.s32.totalorder %s40, 1
      %s42 = scalar_select %p41, 0, %s40
      %s43 = sadd.s32 1, %s34
      %s44 = scalar_select %p41, %s43, %s34
      %p45 = scmp.ge.s32.totalorder %s44, 2
      %s46 = scalar_select %p45, 0, %s44
      %s47 = ssub.s32 %s34, %s46
      %s48 = ssub.s32 %s35, %s42
      %s49 = sor.u32 %s47, %s48
      %p50 = scmp.eq.s32.totalorder %s49, 0
      %s52 = sadd.s32 %s51, 1
      %s53 = scalar_select %p50, %s51, %s52
      %p56 = pneg %p50
      %p57 = scmp.eq.s32.totalorder %s27, 1
      %p58 = por %p56, %p57
      %p59 = scmp.ne.s32.totalorder %s51, %s54
      %p60 = scmp.eq.s32.totalorder %s27, 0
      %p61 = por %p59, %p60
      %p62 = scmp.ne.s32.totalorder %s51, %s54
      %p63 = scmp.eq.s32.totalorder %s32, 1
      %p64 = por %p62, %p63
      %p65 = scmp.ne.s32.totalorder %s54, %s55
      %p66 = scmp.eq.s32.totalorder %s32, 0
      %p67 = por %p65, %p66
      %p68 = scmp.ne.s32.totalorder %s54, %s55
      %p69 = scmp.eq.s32.totalorder %s33, 1
      %p70 = por %p68, %p69
      %p72 = scmp.ne.s32.totalorder %s55, %s71
      %p73 = scmp.eq.s32.totalorder %s33, 0
      %p74 = por %p72, %p73
      %s75 = ssub.s32 %s34, %s46
      %s76 = ssub.s32 %s35, %s42
      %s77 = sor.u32 %s75, %s76
      %p78 = scmp.eq.s32.totalorder %s77, 0
      %s80 = sadd.s32 %s79, 1
      %s81 = scalar_select %p78, %s79, %s80
      %p84 = pneg %p78
      %p85 = scmp.eq.s32.totalorder %s27, 1
      %p86 = por %p84, %p85
      %p87 = scmp.ne.s32.totalorder %s79, %s82
      %p88 = scmp.eq.s32.totalorder %s27, 0
      %p89 = por %p87, %p88
      %p90 = scmp.ne.s32.totalorder %s79, %s82
      %p91 = scmp.eq.s32.totalorder %s32, 1
      %p92 = por %p90, %p91
      %p93 = scmp.ne.s32.totalorder %s82, %s83
      %p94 = scmp.eq.s32.totalorder %s32, 0
      %p95 = por %p93, %p94
      %p96 = scmp.ne.s32.totalorder %s82, %s83
      %p97 = scmp.eq.s32.totalorder %s33, 1
      %p98 = por %p96, %p97
      %p100 = scmp.ne.s32.totalorder %s83, %s99
      %p101 = scmp.eq.s32.totalorder %s33, 0
      %p102 = por %p100, %p101
      %s104 = sadd.s32 %s103, 1
      %p107 = scmp.eq.s32.totalorder %s27, 1
      %p108 = scmp.ne.s32.totalorder %s103, %s105
      %p109 = scmp.eq.s32.totalorder %s27, 0
      %p110 = por %p108, %p109
      %p111 = scmp.ne.s32.totalorder %s103, %s105
      %p112 = scmp.eq.s32.totalorder %s32, 1
      %p113 = por %p111, %p112
      %p114 = scmp.ne.s32.totalorder %s105, %s106
      %p115 = scmp.eq.s32.totalorder %s32, 0
      %p116 = por %p114, %p115
      %p117 = scmp.ne.s32.totalorder %s105, %s106
      %p118 = scmp.eq.s32.totalorder %s33, 1
      %p119 = por %p117, %p118
      %p121 = scmp.ne.s32.totalorder %s106, %s120
      %p122 = scmp.eq.s32.totalorder %s33, 0
      %p123 = por %p121, %p122
      %s125 = sadd.s32 %s124, 1
      %p128 = scmp.eq.s32.totalorder %s27, 1
      %p129 = scmp.ne.s32.totalorder %s124, %s126
      %p130 = scmp.eq.s32.totalorder %s27, 0
      %p131 = por %p129, %p130
      %p132 = scmp.ne.s32.totalorder %s124, %s126
      %p133 = scmp.eq.s32.totalorder %s32, 1
      %p134 = por %p132, %p133
      %p135 = scmp.ne.s32.totalorder %s126, %s127
      %p136 = scmp.eq.s32.totalorder %s32, 0
      %p137 = por %p135, %p136
      %p138 = scmp.ne.s32.totalorder %s126, %s127
      %p139 = scmp.eq.s32.totalorder %s33, 1
      %p140 = por %p138, %p139
      %p142 = scmp.ne.s32.totalorder %s127, %s141
      %p143 = scmp.eq.s32.totalorder %s33, 0
      %p144 = por %p142, %p143
      %s146 = sadd.s32 %s145, 1
      %p149 = scmp.eq.s32.totalorder %s27, 1
      %p150 = scmp.ne.s32.totalorder %s145, %s147
      %p151 = scmp.eq.s32.totalorder %s27, 0
      %p152 = por %p150, %p151
      %p153 = scmp.ne.s32.totalorder %s145, %s147
      %p154 = scmp.eq.s32.totalorder %s32, 1
      %p155 = por %p153, %p154
      %p156 = scmp.ne.s32.totalorder %s147, %s148
      %p157 = scmp.eq.s32.totalorder %s32, 0
      %p158 = por %p156, %p157
      %p159 = scmp.ne.s32.totalorder %s147, %s148
      %p160 = scmp.eq.s32.totalorder %s33, 1
      %p161 = por %p159, %p160
      %p163 = scmp.ne.s32.totalorder %s148, %s162
      %p164 = scmp.eq.s32.totalorder %s33, 0
      %p165 = por %p163, %p164
      %s167 = sadd.s32 %s166, 1
      %p170 = scmp.eq.s32.totalorder %s27, 1
      %p171 = scmp.ne.s32.totalorder %s166, %s168
      %p172 = scmp.eq.s32.totalorder %s27, 0
      %p173 = por %p171, %p172
      %p174 = scmp.ne.s32.totalorder %s166, %s168
      %p175 = scmp.eq.s32.totalorder %s32, 1
      %p176 = por %p174, %p175
      %p177 = scmp.ne.s32.totalorder %s168, %s169
      %p178 = scmp.eq.s32.totalorder %s32, 0
      %p179 = por %p177, %p178
      %p180 = scmp.ne.s32.totalorder %s168, %s169
      %p181 = scmp.eq.s32.totalorder %s33, 1
      %p182 = por %p180, %p181
      %p184 = scmp.ne.s32.totalorder %s169, %s183
      %p185 = scmp.eq.s32.totalorder %s33, 0
      %p186 = por %p184, %p185
      %s187 = ssub.s32 %s34, %s46
      %s188 = ssub.s32 %s35, %s42
      %s189 = sor.u32 %s187, %s188
      %p190 = scmp.eq.s32.totalorder %s189, 0
      %s192 = sadd.s32 %s191, 1
      %s193 = scalar_select %p190, %s191, %s192
      %p196 = pneg %p190
      %p197 = scmp.eq.s32.totalorder %s27, 1
      %p198 = por %p196, %p197
      %p199 = scmp.ne.s32.totalorder %s191, %s194
      %p200 = scmp.eq.s32.totalorder %s27, 0
      %p201 = por %p199, %p200
      %p202 = scmp.ne.s32.totalorder %s191, %s194
      %p203 = scmp.eq.s32.totalorder %s32, 1
      %p204 = por %p202, %p203
      %p205 = scmp.ne.s32.totalorder %s194, %s195
      %p206 = scmp.eq.s32.totalorder %s32, 0
      %p207 = por %p205, %p206
      %p208 = scmp.ne.s32.totalorder %s194, %s195
      %p209 = scmp.eq.s32.totalorder %s33, 1
      %p210 = por %p208, %p209
      %p212 = scmp.ne.s32.totalorder %s195, %s211
      %p213 = scmp.eq.s32.totalorder %s33, 0
      %p214 = por %p212, %p213
      %s215 = ssub.s32 %s34, %s46
      %s216 = ssub.s32 %s35, %s42
      %s217 = sor.u32 %s215, %s216
      %p218 = scmp.eq.s32.totalorder %s217, 0
      %s220 = sadd.s32 %s219, 1
      %s221 = scalar_select %p218, %s219, %s220
      %p224 = pneg %p218
      %p225 = scmp.eq.s32.totalorder %s27, 1
      %p226 = por %p224, %p225
      %p227 = scmp.ne.s32.totalorder %s219, %s222
      %p228 = scmp.eq.s32.totalorder %s27, 0
      %p229 = por %p227, %p228
      %p230 = scmp.ne.s32.totalorder %s219, %s222
      %p231 = scmp.eq.s32.totalorder %s32, 1
      %p232 = por %p230, %p231
      %p233 = scmp.ne.s32.totalorder %s222, %s223
      %p234 = scmp.eq.s32.totalorder %s32, 0
      %p235 = por %p233, %p234
      %p236 = scmp.ne.s32.totalorder %s222, %s223
      %p237 = scmp.eq.s32.totalorder %s33, 1
      %p238 = por %p236, %p237
      %p240 = scmp.ne.s32.totalorder %s223, %s239
      %p241 = scmp.eq.s32.totalorder %s33, 0
      %p242 = por %p240, %p241
      %p243 = scmp.le.s32.totalorder 1, %s27
      %p244 = scmp.lt.s32.totalorder %s27, 3
      %p245 = pnand %p243, %p244
      %p246 = pneg %p245
      // Predicated region
      $region9: #{tpu_custom_call.1} parent=5 // pred_check
        _
      $region10: #{tpu_custom_call.1} parent=5 // pred_check_branch
        %248 = sbr.rel (%p245) target = $region12
      $region11: #{tpu_custom_call.1} parent=5 // pred_region
        %s249 = ssub.s32 %s27, 1
        // Predicated region
        $region13: #{tpu_custom_call.1} parent=11 // pred_check
          %p250 = pneg %p116
        $region14: #{tpu_custom_call.1} parent=11 // pred_check_branch
          %252 = sbr.rel (%p250) target = $region16
        $region15: #{tpu_custom_call.1} parent=11 // pred_region
          %s254 = ssub.s32 256, 256
          %255 = vsyncadd [#allocation6], %s254
          %s256 = sshll.u32 [#allocation7], 4
          %s257 = int_to_ptr.vmem [resolvable:$true] %s256
          %262 = dma.hbm_to_vmem [thread:$0]  %s2, 256, %s257, [#allocation6], 64, 64, 4
        $region16: #{tpu_custom_call.1} parent=11 // pred_fallthru
          _
        // Predicated region
        $region17: #{tpu_custom_call.1} parent=11 // pred_check
          %p263 = pneg %p137
        $region18: #{tpu_custom_call.1} parent=11 // pred_check_branch
          %265 = sbr.rel (%p263) target = $region20
        $region19: #{tpu_custom_call.1} parent=11 // pred_region
          _
        $region20: #{tpu_custom_call.1} parent=11 // pred_fallthru
          _
        // Predicated region
        $region21: #{tpu_custom_call.1} parent=11 // pred_check
          %p266 = pneg %p158
        $region22: #{tpu_custom_call.1} parent=11 // pred_check_branch
          %268 = sbr.rel (%p266) target = $region24
        $region23: #{tpu_custom_call.1} parent=11 // pred_region
          %s270 = ssub.s32 256, 256
          %271 = vsyncadd [#allocation9], %s270
          %s272 = sshll.u32 [#allocation8], 4
          %s273 = int_to_ptr.vmem [resolvable:$true] %s272
          %278 = dma.hbm_to_vmem [thread:$0]  %s4, 256, %s273, [#allocation9], 64, 64, 4
        $region24: #{tpu_custom_call.1} parent=11 // pred_fallthru
          _
        // Predicated region
        $region25: #{tpu_custom_call.1} parent=11 // pred_check
          %p279 = pneg %p179
        $region26: #{tpu_custom_call.1} parent=11 // pred_check_branch
          %281 = sbr.rel (%p279) target = $region28
        $region27: #{tpu_custom_call.1} parent=11 // pred_region
          _
        $region28: #{tpu_custom_call.1} parent=11 // pred_fallthru
          _
      $region12: #{tpu_custom_call.1} parent=5 // pred_fallthru
        _
      %p282 = scmp.lt.s32.totalorder %s27, 2
      // Predicated region
      $region29: #{tpu_custom_call.1} parent=5 // pred_check
        %p283 = pneg %p282
      $region30: #{tpu_custom_call.1} parent=5 // pred_check_branch
        %285 = sbr.rel (%p283) target = $region32
      $region31: #{tpu_custom_call.1} parent=5 // pred_region
        // Predicated region
        $region33: #{tpu_custom_call.1} parent=31 // pred_check
          %p286 = pneg %p61
        $region34: #{tpu_custom_call.1} parent=31 // pred_check_branch
          %288 = sbr.rel (%p286) target = $region36
        $region35: #{tpu_custom_call.1} parent=31 // pred_region
          %s289 = sand.u32 %s51, 1
          %s290 = scalar_lea.sflag [#allocation3], %s289
          %s291 = sand.u32 %s51, 1
          %s292 = smul.addr %s291, 8
          %s293 = scalar_lea.vmem [#allocation2], %s292
          %s295 = ssub.s32 128, 128
          %296 = vsyncadd %s290, %s295
          %s297 = sadd.s32 %s35, %s34
          %s298 = smul.addr %s297, 128
          %s299 = scalar_lea.hbm %s0, %s298
          %s301 = sshll.u32 %s293, 4
          %s302 = int_to_ptr.vmem [resolvable:$true] %s301
          %304 = dma.hbm_to_vmem [thread:$0]  %s299, 128, %s302, %s290
        $region36: #{tpu_custom_call.1} parent=31 // pred_fallthru
          _
        // Predicated region
        $region37: #{tpu_custom_call.1} parent=31 // pred_check
          %p305 = pneg %p89
        $region38: #{tpu_custom_call.1} parent=31 // pred_check_branch
          %307 = sbr.rel (%p305) target = $region40
        $region39: #{tpu_custom_call.1} parent=31 // pred_region
          %s308 = sand.u32 %s27, 1
          %s309 = scalar_lea.sflag [#allocation6], %s308
          %s310 = sand.u32 %s79, 1
          %s311 = smul.addr %s310, 8
          %s312 = scalar_lea.vmem [#allocation5], %s311
          %s314 = ssub.s32 128, 128
          %315 = vsyncadd %s309, %s314
          %s316 = sadd.s32 %s35, %s34
          %s317 = smul.addr %s316, 128
          %s318 = scalar_lea.hbm %s1, %s317
          %s320 = sshll.u32 %s312, 4
          %s321 = int_to_ptr.vmem [resolvable:$true] %s320
          %323 = dma.hbm_to_vmem [thread:$0]  %s318, 128, %s321, %s309
        $region40: #{tpu_custom_call.1} parent=31 // pred_fallthru
          _
      $region32: #{tpu_custom_call.1} parent=5 // pred_fallthru
        _
      %p324 = scmp.le.s32.totalorder 1, %s27
      %p325 = scmp.lt.s32.totalorder %s27, 3
      %p326 = pnand %p324, %p325
      %p327 = pneg %p326
      // Predicated region
      $region41: #{tpu_custom_call.1} parent=5 // pred_check
        _
      $region42: #{tpu_custom_call.1} parent=5 // pred_check_branch
        %329 = sbr.rel (%p326) target = $region44
      $region43: #{tpu_custom_call.1} parent=5 // pred_region
        %s330 = ssub.s32 %s27, 1
        %s331 = sand.u32 %s54, 1
        %s332 = scalar_lea.sflag [#allocation3], %s331
        %s333 = sand.u32 %s54, 1
        %s334 = smul.addr %s333, 8
        %s335 = scalar_lea.vmem [#allocation2], %s334
        // Predicated region
        $region45: #{tpu_custom_call.1} parent=43 // pred_check
          %p336 = pneg %p67
        $region46: #{tpu_custom_call.1} parent=43 // pred_check_branch
          %338 = sbr.rel (%p336) target = $region48
        $region47: #{tpu_custom_call.1} parent=43 // pred_region
          %339 = dma.done %s332, 128
        $region48: #{tpu_custom_call.1} parent=43 // pred_fallthru
          _
        %s340 = sand.u32 %s32, 1
        %s341 = scalar_lea.sflag [#allocation6], %s340
        %s342 = sand.u32 %s82, 1
        %s343 = smul.addr %s342, 8
        %s344 = scalar_lea.vmem [#allocation5], %s343
        // Predicated region
        $region49: #{tpu_custom_call.1} parent=43 // pred_check
          %p345 = pneg %p95
        $region50: #{tpu_custom_call.1} parent=43 // pred_check_branch
          %347 = sbr.rel (%p345) target = $region52
        $region51: #{tpu_custom_call.1} parent=43 // pred_region
          %348 = dma.done %s341, 128
        $region52: #{tpu_custom_call.1} parent=43 // pred_fallthru
          _
        // Predicated region
        $region53: #{tpu_custom_call.1} parent=43 // pred_check
          %p349 = pneg %p116
        $region54: #{tpu_custom_call.1} parent=43 // pred_check_branch
          %351 = sbr.rel (%p349) target = $region56
        $region55: #{tpu_custom_call.1} parent=43 // pred_region
          %352 = dma.done [#allocation6], 256
        $region56: #{tpu_custom_call.1} parent=43 // pred_fallthru
          _
        // Predicated region
        $region57: #{tpu_custom_call.1} parent=43 // pred_check
          %p353 = pneg %p158
        $region58: #{tpu_custom_call.1} parent=43 // pred_check_branch
          %355 = sbr.rel (%p353) target = $region60
        $region59: #{tpu_custom_call.1} parent=43 // pred_region
          %356 = dma.done [#allocation9], 256
        $region60: #{tpu_custom_call.1} parent=43 // pred_fallthru
          _
        %s357 = sand.u32 %s54, 1
        %s358 = scalar_lea.sflag [#allocation3], %s357
        %s359 = sand.u32 %s54, 1
        %s360 = smul.addr %s359, 8
        %s361 = scalar_lea.vmem [#allocation2], %s360
        %p362 = pneg %p67
        %p363 = pneg %p64
        %s364 = sand.u32 %s32, 1
        %s365 = scalar_lea.sflag [#allocation6], %s364
        %s366 = sand.u32 %s82, 1
        %s367 = smul.addr %s366, 8
        %s368 = scalar_lea.vmem [#allocation5], %s367
        %p369 = pneg %p95
        %p370 = pneg %p92
        %p371 = pneg %p116
        %p372 = pneg %p113
        %p373 = pneg %p137
        %p374 = pneg %p134
        %p375 = pneg %p158
        %p376 = pneg %p155
        %p377 = pneg %p179
        %p378 = pneg %p176
        %p379 = pneg %p207
        %p380 = pneg %p204
        %s381 = sand.u32 %s194, 1
        %s382 = scalar_lea.sflag [#allocation4], %s381
        %s383 = sand.u32 %s194, 1
        %s384 = smul.addr %s383, 16
        %s385 = scalar_lea.vmem [#allocation10], %s384
        %p386 = pneg %p235
        %p387 = pneg %p232
        %s388 = sand.u32 %s222, 1
        %s389 = scalar_lea.sflag [#allocation12], %s388
        %s390 = sand.u32 %s222, 1
        %s391 = smul.addr %s390, 16
        %s392 = scalar_lea.vmem [#allocation11], %s391
        %v394 = vld [vmem:[%s335] sm:$0xff]
        %v395 = vpack.c.bf16 %v394, %v394
        %v396 = vld [vmem:[%s344] sm:$0xff]
        %v397 = vpack.c.bf16 %v396, %v396
        %v398 = vld [vmem:[#allocation7] sm:$0xf]
        %v399 = vld [vmem:[#allocation7 + $0x4] sm:$0xf]
        %v400 = vld [vmem:[#allocation7 + $0x8] sm:$0xf]
        %v401 = vld [vmem:[#allocation7 + $0xc] sm:$0xf]
        %v402 = vld [vmem:[%s3] sm:$0x1]
        %v404 = vlaneseq
        %v405 = vshrl.u32 %v404, 7
        %v406 = vsub.s32 0, %v405
        %v407 = vrot.slane %v402, %v406
        %v413 = vunpack.c.l.b16 %v398
        %v414 = vunpack.c.l.b16 %v399
        %v415 = vunpack.c.l.b16 %v400
        %v416 = vunpack.c.l.b16 %v401
        %v417 = vpack.c.b16 %v414, %v413
        %v418 = vpack.c.b16 %v416, %v415
        %vm421 = vcmask 261120
        %v423 = vsel %vm421, %v395, 0
        %425 = vmatprep.subr.bf16.mxu0 0
        %426 = vmatpush1.bf16.msra.mxu0 %v417
        %427 = vmatprep.subr.bf16.mxu0 0
        %428 = vmatpush1.bf16.msra.mxu0 %v418
        %429 = vmatprep.subr.bf16.mxu0 0
        %430 = vmatpush1.bf16.msra.mxu0 0
        %431 = vmatprep.subr.bf16.mxu0 0
        %432 = vmatpush1.bf16.msra.mxu0 0
        %433 = vmatprep.subr.bf16.mxu0 0
        %434 = vmatpush1.bf16.msra.mxu0 0
        %435 = vmatprep.subr.bf16.mxu0 0
        %436 = vmatpush1.bf16.msra.mxu0 0
        %437 = vmatprep.subr.bf16.mxu0 0
        %438 = vmatpush1.bf16.msra.mxu0 0
        %439 = vmatprep.subr.bf16.mxu0 0
        %440 = vmatpush1.bf16.msra.mxu0 0
        %441 = vmatprep.subr.bf16.mxu0 0
        %442 = vmatpush1.bf16.msra.mxu0 0
        %443 = vmatprep.subr.bf16.mxu0 0
        %444 = vmatpush1.bf16.msra.mxu0 0
        %445 = vmatprep.subr.bf16.mxu0 0
        %446 = vmatpush1.bf16.msra.mxu0 0
        %447 = vmatprep.subr.bf16.mxu0 0
        %448 = vmatpush1.bf16.msra.mxu0 0
        %449 = vmatprep.subr.bf16.mxu0 0
        %450 = vmatpush1.bf16.msra.mxu0 0
        %451 = vmatprep.subr.bf16.mxu0 0
        %452 = vmatpush1.bf16.msra.mxu0 0
        %453 = vmatprep.subr.bf16.mxu0 0
        %454 = vmatpush1.bf16.msra.mxu0 0
        %455 = vmatprep.subr.bf16.mxu0 0
        %456 = vmatpush1.bf16.msra.mxu0 0
        %457 = vmatprep.mubr.bf16.mxu0 0
        %458 = vmatmul.mubr.bf16.gmra.mrb[0].mxu0 %v423
        %v459 = vpop.f32.mrb[0].mxu0
        %v460 = vadd.f32 %v407, %v459
        %v461 = vpop.f32.mrb[0].mxu0
        %v462 = vpop.f32.mrb[0].mxu0
        %v463 = vpop.f32.mrb[0].mxu0
        %464 = vdwg.mxu0
        %v465 = vpack.c.bf16 %v460, %v460
        %v466 = vld [vmem:[#allocation8] sm:$0xf]
        %v467 = vld [vmem:[#allocation8 + $0x4] sm:$0xf]
        %v468 = vld [vmem:[#allocation8 + $0x8] sm:$0xf]
        %v469 = vld [vmem:[#allocation8 + $0xc] sm:$0xf]
        %v470 = vld [vmem:[%s5] sm:$0x1]
        %v472 = vlaneseq
        %v473 = vshrl.u32 %v472, 7
        %v474 = vsub.s32 0, %v473
        %v475 = vrot.slane %v470, %v474
        %v481 = vunpack.c.l.b16 %v466
        %v482 = vunpack.c.l.b16 %v467
        %v483 = vunpack.c.l.b16 %v468
        %v484 = vunpack.c.l.b16 %v469
        %v485 = vpack.c.b16 %v482, %v481
        %v486 = vpack.c.b16 %v484, %v483
        %v490 = vsel %vm421, %v397, 0
        %492 = vmatprep.subr.bf16.mxu0 0
        %493 = vmatpush1.bf16.msra.mxu0 %v485
        %494 = vmatprep.subr.bf16.mxu0 0
        %495 = vmatpush1.bf16.msra.mxu0 %v486
        %496 = vmatprep.subr.bf16.mxu0 0
        %497 = vmatpush1.bf16.msra.mxu0 0
        %498 = vmatprep.subr.bf16.mxu0 0
        %499 = vmatpush1.bf16.msra.mxu0 0
        %500 = vmatprep.subr.bf16.mxu0 0
        %501 = vmatpush1.bf16.msra.mxu0 0
        %502 = vmatprep.subr.bf16.mxu0 0
        %503 = vmatpush1.bf16.msra.mxu0 0
        %504 = vmatprep.subr.bf16.mxu0 0
        %505 = vmatpush1.bf16.msra.mxu0 0
        %506 = vmatprep.subr.bf16.mxu0 0
        %507 = vmatpush1.bf16.msra.mxu0 0
        %508 = vmatprep.subr.bf16.mxu0 0
        %509 = vmatpush1.bf16.msra.mxu0 0
        %510 = vmatprep.subr.bf16.mxu0 0
        %511 = vmatpush1.bf16.msra.mxu0 0
        %512 = vmatprep.subr.bf16.mxu0 0
        %513 = vmatpush1.bf16.msra.mxu0 0
        %514 = vmatprep.subr.bf16.mxu0 0
        %515 = vmatpush1.bf16.msra.mxu0 0
        %516 = vmatprep.subr.bf16.mxu0 0
        %517 = vmatpush1.bf16.msra.mxu0 0
        %518 = vmatprep.subr.bf16.mxu0 0
        %519 = vmatpush1.bf16.msra.mxu0 0
        %520 = vmatprep.subr.bf16.mxu0 0
        %521 = vmatpush1.bf16.msra.mxu0 0
        %522 = vmatprep.subr.bf16.mxu0 0
        %523 = vmatpush1.bf16.msra.mxu0 0
        %524 = vmatprep.mubr.bf16.mxu0 0
        %525 = vmatmul.mubr.bf16.gmra.mrb[0].mxu0 %v490
        %v526 = vpop.f32.mrb[0].mxu0
        %v527 = vadd.f32 %v475, %v526
        %v528 = vpop.f32.mrb[0].mxu0
        %v529 = vpop.f32.mrb[0].mxu0
        %v530 = vpop.f32.mrb[0].mxu0
        %531 = vdwg.mxu0
        %v532 = vpack.c.bf16 %v527, %v527
        %vm533 = vcmask 60416
        %534 = vst.msk [vmem:[%s385] sm:$0xf] %vm533, %v465
        %535 = vst.msk [vmem:[%s392] sm:$0xf] %vm533, %v532
        %v537 = vunpack.c.l.b16 %v465
        %v538 = vpack.c.b16 %v537, %v537
        %539 = vrot.lane.b32.xlu0 %v538, 120
        %v540 = vpop.permute.xlu0 %539
        %s542 = scalar_lea.vmem %s385, 4 [#allocation10]
        %543 = vst.msk [vmem:[%s542] sm:$0xf] %vm533, %v540
        %v545 = vunpack.c.l.b16 %v532
        %v546 = vpack.c.b16 %v545, %v545
        %547 = vrot.lane.b32.xlu0 %v546, 120
        %v548 = vpop.permute.xlu0 %547
        %s550 = scalar_lea.vmem %s392, 4 [#allocation11]
        %551 = vst.msk [vmem:[%s550] sm:$0xf] %vm533, %v548
        %552 = vrot.lane.b32.xlu0 %v538, 112
        %v553 = vpop.permute.xlu0 %552
        %s555 = scalar_lea.vmem %s385, 8 [#allocation10]
        %556 = vst.msk [vmem:[%s555] sm:$0xf] %vm533, %v553
        %557 = vrot.lane.b32.xlu0 %v546, 112
        %v558 = vpop.permute.xlu0 %557
        %s560 = scalar_lea.vmem %s392, 8 [#allocation11]
        %561 = vst.msk [vmem:[%s560] sm:$0xf] %vm533, %v558
        %562 = vrot.lane.b32.xlu0 %v538, 104
        %v563 = vpop.permute.xlu0 %562
        %s565 = scalar_lea.vmem %s385, 12 [#allocation10]
        %566 = vst.msk [vmem:[%s565] sm:$0xf] %vm533, %v563
        %567 = vrot.lane.b32.xlu0 %v546, 104
        %v568 = vpop.permute.xlu0 %567
        %s570 = scalar_lea.vmem %s392, 12 [#allocation11]
        %571 = vst.msk [vmem:[%s570] sm:$0xf] %vm533, %v568
        %s572 = sand.u32 %s194, 1
        %s573 = scalar_lea.sflag [#allocation4], %s572
        %s574 = sand.u32 %s194, 1
        %s575 = smul.addr %s574, 16
        %s576 = scalar_lea.vmem [#allocation10], %s575
        %s577 = sand.u32 %s222, 1
        %s578 = scalar_lea.sflag [#allocation12], %s577
        %s579 = sand.u32 %s222, 1
        %s580 = smul.addr %s579, 16
        %s581 = scalar_lea.vmem [#allocation11], %s580
        // Predicated region
        $region61: #{tpu_custom_call.1} parent=43 // pred_check
          %p582 = pneg %p204
        $region62: #{tpu_custom_call.1} parent=43 // pred_check_branch
          %584 = sbr.rel (%p582) target = $region64
        $region63: #{tpu_custom_call.1} parent=43 // pred_region
          %s586 = ssub.s32 256, 256
          %587 = vsyncadd %s573, %s586
          %s588 = smul.addr %s36, 4
          %s589 = sadd.s32 %s37, %s588
          %s590 = smul.addr %s589, 64
          %s591 = scalar_lea.hbm %s6, %s590
          %s592 = sshll.u32 %s576, 4
          %s593 = int_to_ptr.vmem [resolvable:$true] %s592
          %598 = dma.vmem_to_hbm [thread:$0]  %s593, 256, %s591, %s573, 64, 64, 4
        $region64: #{tpu_custom_call.1} parent=43 // pred_fallthru
          _
        // Predicated region
        $region65: #{tpu_custom_call.1} parent=43 // pred_check
          %p599 = pneg %p232
        $region66: #{tpu_custom_call.1} parent=43 // pred_check_branch
          %601 = sbr.rel (%p599) target = $region68
        $region67: #{tpu_custom_call.1} parent=43 // pred_region
          %s603 = ssub.s32 256, 256
          %604 = vsyncadd %s578, %s603
          %s605 = smul.addr %s36, 4
          %s606 = sadd.s32 %s37, %s605
          %s607 = smul.addr %s606, 64
          %s608 = scalar_lea.hbm %s7, %s607
          %s609 = sshll.u32 %s581, 4
          %s610 = int_to_ptr.vmem [resolvable:$true] %s609
          %615 = dma.vmem_to_hbm [thread:$0]  %s610, 256, %s608, %s578, 64, 64, 4
        $region68: #{tpu_custom_call.1} parent=43 // pred_fallthru
          _
      $region44: #{tpu_custom_call.1} parent=5 // pred_fallthru
        _
      %p616 = scmp.le.s32.totalorder 2, %s27
      // Predicated region
      $region69: #{tpu_custom_call.1} parent=5 // pred_check
        %p617 = pneg %p616
      $region70: #{tpu_custom_call.1} parent=5 // pred_check_branch
        %619 = sbr.rel (%p617) target = $region72
      $region71: #{tpu_custom_call.1} parent=5 // pred_region
        %s620 = ssub.s32 %s27, 2
        // Predicated region
        $region73: #{tpu_custom_call.1} parent=71 // pred_check
          %p621 = pneg %p210
        $region74: #{tpu_custom_call.1} parent=71 // pred_check_branch
          %623 = sbr.rel (%p621) target = $region76
        $region75: #{tpu_custom_call.1} parent=71 // pred_region
          %s624 = sand.u32 %s195, 1
          %s625 = scalar_lea.sflag [#allocation4], %s624
          %s626 = sand.u32 %s195, 1
          %s627 = smul.addr %s626, 16
          %s628 = scalar_lea.vmem [#allocation10], %s627
          %629 = dma.done %s625, 256
        $region76: #{tpu_custom_call.1} parent=71 // pred_fallthru
          _
        // Predicated region
        $region77: #{tpu_custom_call.1} parent=71 // pred_check
          %p630 = pneg %p238
        $region78: #{tpu_custom_call.1} parent=71 // pred_check_branch
          %632 = sbr.rel (%p630) target = $region80
        $region79: #{tpu_custom_call.1} parent=71 // pred_region
          %s633 = sand.u32 %s223, 1
          %s634 = scalar_lea.sflag [#allocation12], %s633
          %s635 = sand.u32 %s223, 1
          %s636 = smul.addr %s635, 16
          %s637 = scalar_lea.vmem [#allocation11], %s636
          %638 = dma.done %s634, 256
        $region80: #{tpu_custom_call.1} parent=71 // pred_fallthru
          _
      $region72: #{tpu_custom_call.1} parent=5 // pred_fallthru
        _
    $region6: #{tpu_custom_call.1} parent=1 // loop_footer
      %s31 = sadd.s32 1, %s27
    $region7: #{tpu_custom_call.1} parent=1 // loop_footer_branch
      %26 = sbr.rel target = $region3
    $region8: #{tpu_custom_call.1} parent=1 // loop_exit
      _
    %639 = vsyncpa [#allocation3], 1
    %s640 = scalar_lea.sflag [#allocation3], 1
    %641 = vsyncpa %s640, 1
    %642 = vsyncpa [#allocation6], 1
    %s643 = scalar_lea.sflag [#allocation6], 1
    %644 = vsyncpa %s643, 1
    %645 = vsyncpa [#allocation9], 1
    %646 = vsyncpa [#allocation4], 1
    %s647 = scalar_lea.sflag [#allocation4], 1
    %648 = vsyncpa %s647, 1
    %649 = vsyncpa [#allocation12], 1
    %s650 = scalar_lea.sflag [#allocation12], 1
    %651 = vsyncpa %s650, 1

</llo_original>
